<compile_context>
chip_gen: v7x
topology: tpu7x:2x2x1
jax: 0.10.0
libtpu: 0.0.40
codegen_flags: <defaults>
</compile_context>

<pallas_src>
import jax
import jax.numpy as jnp
from jax.experimental import pallas as pl
from jax.experimental.pallas import tpu as pltpu


DEFAULT_BLOCK_BATCH = 64 * 1024     # lanes per grid step (multiple of 128)
_MAX_BLOCK_BATCH = 128 * 1024       # hard cap so VMEM stays comfortable on v7x


def _round_up(x, m):
    return ((x + m - 1) // m) * m


def qt_kernel(x_ref, w1_ref, b1_ref, w2_ref, b2_ref, w3_ref, b3_ref, o_ref):
    """x_ref: (n_obs, tb)  weights pre-padded:
         w1 (8, n_obs)  b1 (8, 1)
         w2 (16, 8)     b2 (16, 1)
         w3 (A, 16)     b3 (A, 1)
    o_ref: (A, tb). Batch lives on lanes -> every store is lane-dense.
    """
    x = x_ref[...]                                   # (n_obs, tb)
    tb = x.shape[1]

    # Layer 1: tiny unaligned fan-in (n_obs) -> unrolled VPU rank-1 MAC with a
    # bias-seeded accumulator. Padded rows (6,7) of w1/b1 are zero, so rows 6,7
    # of h1 are exactly 0 after ReLU.
    w1 = w1_ref[...]                                 # (8, n_obs)
    acc = jnp.broadcast_to(b1_ref[...], (w1.shape[0], tb))
    for k in range(x.shape[0]):                      # static unroll, n_obs small
        acc = acc + w1[:, k:k + 1] * x[k:k + 1, :]
    h1 = jnp.maximum(acc, 0.0)                       # (8, tb), rows>=6 are 0

    # Layers 2 and 3: contraction dims are 8 and 16 (sublane-aligned by the
    # zero-padding done in _prepare_params) -> run on the otherwise-idle MXU.
    h2 = jnp.maximum(
        jnp.dot(w2_ref[...], h1, preferred_element_type=jnp.float32) + b2_ref[...],
        0.0)                                         # (16, tb), row 15 is 0
    out = jnp.dot(w3_ref[...], h2, preferred_element_type=jnp.float32) + b3_ref[...]
    o_ref[...] = out.astype(o_ref.dtype)             # (A, tb), lane-dense store


def _prepare_params(params):
    """Zero-pad PyTorch-layout params so MXU contraction dims are 8/16 wide.

    Zero rows/cols make the padded hidden units exactly 0 after ReLU, so the
    padded contractions are bit-identical to the unpadded math.
    """
    def pad2(a, rows, cols):
        a = a.astype(jnp.float32)
        return jnp.pad(a, ((0, rows - a.shape[0]), (0, cols - a.shape[1])))

    w1, b1 = params["w1"], params["b1"]
    w2, b2 = params["w2"], params["b2"]
    w3, b3 = params["w3"], params["b3"]
    h1p = _round_up(w1.shape[0], 8)      # 6  -> 8
    h2p = _round_up(w2.shape[0], 8)      # 15 -> 16
    return (pad2(w1, h1p, w1.shape[1]), pad2(b1, h1p, 1),
            pad2(w2, h2p, h1p),         pad2(b2, h2p, 1),
            pad2(w3, w3.shape[0], h2p), b3.astype(jnp.float32))


def qt_forward_t(xt, params, *, block_batch=DEFAULT_BLOCK_BATCH):
    """Preferred entry point: xt is (n_obs, batch) f32 (batch on lanes),
    returns (n_actions, batch) f32. No wrapper-side data movement at all.
    """
    n_obs, batch = xt.shape
    w1p, b1p, w2p, b2p, w3p, b3p = _prepare_params(params)
    n_actions = w3p.shape[0]
    hid1, hid2 = params["w1"].shape[0], params["w2"].shape[0]

    # Batch tile: multiple of 128 (lane-dense stores), as large as sensible to
    # amortize the ~0.35us/step grid overhead, capped so the double-buffered
    # 8-sublane-padded in/out blocks plus in-kernel f32 temporaries stay inside
    # scoped VMEM on every generation (v5e 16MiB default, v6e/v7x 32MiB default,
    # v7x 64MiB physical).
    block_batch = _round_up(max(int(block_batch), 128), 128)
    tb = min(_round_up(batch, 128), block_batch, _MAX_BLOCK_BATCH)

    # At very large batch keep >= 4 grid steps so dimension_semantics=("parallel",)
    # can feed both v7x TensorCores without shrinking steps below ~64K lanes.
    if batch >= 4 * 65536:
        tb = max(128, min(tb, _round_up(pl.cdiv(batch, 4), 128)))

    grid = (pl.cdiv(batch, tb),)   # partial edge block: stores are masked, the
                                   # garbage edge columns never reach HBM.

    def resident(a):
        # Full array, same block every step -> stays resident in VMEM.
        return pl.BlockSpec(a.shape, lambda i: (0,) * a.ndim)

    # VMEM budget: pipeline blocks ~128*tb B (2 bufs x (x + out), 8-sublane pad)
    # + in-kernel temporaries (h1/h2/layer-3 result) ~128*tb B, plus margin.
    vmem_limit = int(min(max(256 * tb + (8 << 20), 32 << 20), 48 << 20))

    flops = 2 * batch * (n_obs * hid1 + hid1 * hid2 + hid2 * n_actions)
    bytes_accessed = 4 * (int(xt.size) + n_actions * batch +
                          sum(int(p.size) for p in (w1p, b1p, w2p, b2p, w3p, b3p)))

    return pl.pallas_call(
        qt_kernel,
        out_shape=jax.ShapeDtypeStruct((n_actions, batch), jnp.float32),
        grid=grid,
        in_specs=[
            pl.BlockSpec((n_obs, tb), lambda i: (0, i)),      # x tile (pipelined)
            resident(w1p), resident(b1p),
            resident(w2p), resident(b2p),
            resident(w3p), resident(b3p),
        ],
        out_specs=pl.BlockSpec((n_actions, tb), lambda i: (0, i)),
        compiler_params=pltpu.CompilerParams(
            dimension_semantics=("parallel",),
            vmem_limit_bytes=vmem_limit,
        ),
        cost_estimate=pl.CostEstimate(
            flops=flops, transcendentals=0, bytes_accessed=bytes_accessed),
    )(xt, w1p, b1p, w2p, b2p, w3p, b3p)


def qt_forward(x, params, *, block_batch=DEFAULT_BLOCK_BATCH):
    """Module-compatible entry: x (batch, n_obs) -> (batch, n_actions).

    The two transposes here are the only wrapper-side data movement; callers
    that can keep activations batch-on-lanes should call qt_forward_t directly.
    """
    out_t = qt_forward_t(x.astype(jnp.float32).T, params, block_batch=block_batch)
    return out_t.T


def init_qt_params(key, n_observations, n_actions):
    """Deterministic init mimicking nn.Linear's U(-1/sqrt(fan_in), 1/sqrt(fan_in)).

    Weights kept in PyTorch layout (out_features, in_features); biases (out, 1).
    """
    dims = [(6, n_observations), (15, 6), (n_actions, 15)]
    params = {}
    for i, (fan_out, fan_in) in enumerate(dims, start=1):
        key, kw, kb = jax.random.split(key, 3)
        bound = 1.0 / (fan_in ** 0.5)
        params[f"w{i}"] = jax.random.uniform(
            kw, (fan_out, fan_in), jnp.float32, -bound, bound)
        params[f"b{i}"] = jax.random.uniform(
            kb, (fan_out, 1), jnp.float32, -bound, bound)
    return params


def qt_reference(x, params):
    h1 = jnp.maximum(x @ params["w1"].T + params["b1"].T, 0.0)
    h2 = jnp.maximum(h1 @ params["w2"].T + params["b2"].T, 0.0)
    return h2 @ params["w3"].T + params["b3"].T


if __name__ == "__main__":
    n_observations, n_actions, batch = 4, 3, 8

    key = jax.random.PRNGKey(0)
    key, kx = jax.random.split(key)
    x = jax.random.normal(kx, (batch, n_observations), jnp.float32)
    params = init_qt_params(key, n_observations, n_actions)

    out = qt_forward(x, params)
    jax.block_until_ready(out)
    ref = qt_reference(x, params)
    assert out.shape == (batch, n_actions)
    assert jnp.allclose(out, ref, atol=1e-5, rtol=1e-5)

    # Exercise a multi-step grid plus a masked partial edge block.
    batch2 = 1000
    key, kx2 = jax.random.split(key)
    x2 = jax.random.normal(kx2, (batch2, n_observations), jnp.float32)
    out2 = qt_forward(x2, params, block_batch=256)
    jax.block_until_ready(out2)
    assert out2.shape == (batch2, n_actions)
    assert jnp.allclose(out2, qt_reference(x2, params), atol=1e-5, rtol=1e-5)

    print("KERNEL_OK")
</pallas_src>

<mosaic_0001>
module attributes {stable_mosaic.version = 11 : i64} {
  func.func @qt_kernel(%arg0: i32, %arg1: memref<4x128xf32, #tpu.memory_space<vmem>>, %arg2: memref<8x4xf32, #tpu.memory_space<vmem>>, %arg3: memref<8x1xf32, #tpu.memory_space<vmem>>, %arg4: memref<16x8xf32, #tpu.memory_space<vmem>>, %arg5: memref<16x1xf32, #tpu.memory_space<vmem>>, %arg6: memref<3x16xf32, #tpu.memory_space<vmem>>, %arg7: memref<3x1xf32, #tpu.memory_space<vmem>>, %arg8: memref<3x128xf32, #tpu.memory_space<vmem>>) attributes {dimension_semantics = [#tpu.dimension_semantics<parallel>], iteration_bounds = array<i64: 1>, scalar_prefetch = 0 : i64, scratch_operands = 0 : i64, tpu.core_type = #tpu.core_type<tc>, window_params = [{transform_indices = @transform_0, window_bounds = array<i64: 4, 128>}, {pipeline_mode = #tpu.pipeline_mode<synchronous>, transform_indices = @transform_1, window_bounds = array<i64: 8, 4>}, {pipeline_mode = #tpu.pipeline_mode<synchronous>, transform_indices = @transform_2, window_bounds = array<i64: 8, 1>}, {pipeline_mode = #tpu.pipeline_mode<synchronous>, transform_indices = @transform_3, window_bounds = array<i64: 16, 8>}, {pipeline_mode = #tpu.pipeline_mode<synchronous>, transform_indices = @transform_4, window_bounds = array<i64: 16, 1>}, {pipeline_mode = #tpu.pipeline_mode<synchronous>, transform_indices = @transform_5, window_bounds = array<i64: 3, 16>}, {pipeline_mode = #tpu.pipeline_mode<synchronous>, transform_indices = @transform_6, window_bounds = array<i64: 3, 1>}, {transform_indices = @transform_7, window_bounds = array<i64: 3, 128>}]} {
    %c0 = arith.constant 0 : index
    %c0_0 = arith.constant 0 : index
    %0 = vector.load %arg1[%c0, %c0_0] : memref<4x128xf32, #tpu.memory_space<vmem>>, vector<4x128xf32>
    %c0_1 = arith.constant 0 : index
    %c0_2 = arith.constant 0 : index
    %1 = vector.load %arg2[%c0_1, %c0_2] : memref<8x4xf32, #tpu.memory_space<vmem>>, vector<8x4xf32>
    %c0_3 = arith.constant 0 : index
    %c0_4 = arith.constant 0 : index
    %2 = vector.load %arg3[%c0_3, %c0_4] : memref<8x1xf32, #tpu.memory_space<vmem>>, vector<8x1xf32>
    %3 = vector.shape_cast %2 : vector<8x1xf32> to vector<8x1xf32>
    %4 = vector.broadcast %3 : vector<8x1xf32> to vector<8x128xf32>
    %5 = vector.extract_strided_slice %1 {offsets = [0, 0], sizes = [8, 1], strides = [1, 1]} : vector<8x4xf32> to vector<8x1xf32>
    %6 = vector.extract_strided_slice %0 {offsets = [0, 0], sizes = [1, 128], strides = [1, 1]} : vector<4x128xf32> to vector<1x128xf32>
    %7 = vector.broadcast %5 : vector<8x1xf32> to vector<8x128xf32>
    %8 = vector.broadcast %6 : vector<1x128xf32> to vector<8x128xf32>
    %9 = arith.mulf %7, %8 : vector<8x128xf32>
    %10 = arith.addf %4, %9 : vector<8x128xf32>
    %11 = vector.extract_strided_slice %1 {offsets = [0, 1], sizes = [8, 1], strides = [1, 1]} : vector<8x4xf32> to vector<8x1xf32>
    %12 = vector.extract_strided_slice %0 {offsets = [1, 0], sizes = [1, 128], strides = [1, 1]} : vector<4x128xf32> to vector<1x128xf32>
    %13 = vector.broadcast %11 : vector<8x1xf32> to vector<8x128xf32>
    %14 = vector.broadcast %12 : vector<1x128xf32> to vector<8x128xf32>
    %15 = arith.mulf %13, %14 : vector<8x128xf32>
    %16 = arith.addf %10, %15 : vector<8x128xf32>
    %17 = vector.extract_strided_slice %1 {offsets = [0, 2], sizes = [8, 1], strides = [1, 1]} : vector<8x4xf32> to vector<8x1xf32>
    %18 = vector.extract_strided_slice %0 {offsets = [2, 0], sizes = [1, 128], strides = [1, 1]} : vector<4x128xf32> to vector<1x128xf32>
    %19 = vector.broadcast %17 : vector<8x1xf32> to vector<8x128xf32>
    %20 = vector.broadcast %18 : vector<1x128xf32> to vector<8x128xf32>
    %21 = arith.mulf %19, %20 : vector<8x128xf32>
    %22 = arith.addf %16, %21 : vector<8x128xf32>
    %23 = vector.extract_strided_slice %1 {offsets = [0, 3], sizes = [8, 1], strides = [1, 1]} : vector<8x4xf32> to vector<8x1xf32>
    %24 = vector.extract_strided_slice %0 {offsets = [3, 0], sizes = [1, 128], strides = [1, 1]} : vector<4x128xf32> to vector<1x128xf32>
    %25 = vector.broadcast %23 : vector<8x1xf32> to vector<8x128xf32>
    %26 = vector.broadcast %24 : vector<1x128xf32> to vector<8x128xf32>
    %27 = arith.mulf %25, %26 : vector<8x128xf32>
    %28 = arith.addf %22, %27 : vector<8x128xf32>
    %cst = arith.constant 0.000000e+00 : f32
    %29 = vector.broadcast %cst : f32 to vector<8x128xf32>
    %30 = arith.maximumf %28, %29 : vector<8x128xf32>
    %c0_5 = arith.constant 0 : index
    %c0_6 = arith.constant 0 : index
    %31 = vector.load %arg4[%c0_5, %c0_6] : memref<16x8xf32, #tpu.memory_space<vmem>>, vector<16x8xf32>
    %cst_7 = arith.constant dense<0.000000e+00> : vector<16x128xf32>
    %32 = tpu.matmul %31, %30, %cst_7 {dimension_numbers = #tpu.dot_dimension_numbers<[1], [0], [0], [1], [0, 0, 1, 1], [], []>} : vector<16x8xf32>, vector<8x128xf32>, vector<16x128xf32> -> vector<16x128xf32>
    %c0_8 = arith.constant 0 : index
    %c0_9 = arith.constant 0 : index
    %33 = vector.load %arg5[%c0_8, %c0_9] : memref<16x1xf32, #tpu.memory_space<vmem>>, vector<16x1xf32>
    %34 = vector.broadcast %33 : vector<16x1xf32> to vector<16x128xf32>
    %35 = arith.addf %32, %34 : vector<16x128xf32>
    %cst_10 = arith.constant 0.000000e+00 : f32
    %36 = vector.broadcast %cst_10 : f32 to vector<16x128xf32>
    %37 = arith.maximumf %35, %36 : vector<16x128xf32>
    %c0_11 = arith.constant 0 : index
    %c0_12 = arith.constant 0 : index
    %38 = vector.load %arg6[%c0_11, %c0_12] : memref<3x16xf32, #tpu.memory_space<vmem>>, vector<3x16xf32>
    %cst_13 = arith.constant dense<0.000000e+00> : vector<3x128xf32>
    %39 = tpu.matmul %38, %37, %cst_13 {dimension_numbers = #tpu.dot_dimension_numbers<[1], [0], [0], [1], [0, 0, 1, 1], [], []>} : vector<3x16xf32>, vector<16x128xf32>, vector<3x128xf32> -> vector<3x128xf32>
    %c0_14 = arith.constant 0 : index
    %c0_15 = arith.constant 0 : index
    %40 = vector.load %arg7[%c0_14, %c0_15] : memref<3x1xf32, #tpu.memory_space<vmem>>, vector<3x1xf32>
    %41 = vector.broadcast %40 : vector<3x1xf32> to vector<3x128xf32>
    %42 = arith.addf %39, %41 : vector<3x128xf32>
    %c0_16 = arith.constant 0 : index
    %c0_17 = arith.constant 0 : index
    %43 = vector.load %arg8[%c0_16, %c0_17] : memref<3x128xf32, #tpu.memory_space<vmem>>, vector<3x128xf32>
    tpu.vector_store %arg8[%c0_16, %c0_17], %42 {strides = array<i32>} : memref<3x128xf32, #tpu.memory_space<vmem>>, vector<3x128xf32>,
    return
  }
  func.func @transform_0(%arg0: i32) -> (i32, i32) {
    %c0_i32 = arith.constant 0 : i32
    %c0_i32_0 = arith.constant 0 : i32
    return %c0_i32, %arg0 : i32, i32
  }
  func.func @transform_1(%arg0: i32) -> (i32, i32) {
    %c0_i32 = arith.constant 0 : i32
    %c0_i32_0 = arith.constant 0 : i32
    %c0_i32_1 = arith.constant 0 : i32
    return %c0_i32, %c0_i32_0 : i32, i32
  }
  func.func @transform_2(%arg0: i32) -> (i32, i32) {
    %c0_i32 = arith.constant 0 : i32
    %c0_i32_0 = arith.constant 0 : i32
    %c0_i32_1 = arith.constant 0 : i32
    return %c0_i32, %c0_i32_0 : i32, i32
  }
  func.func @transform_3(%arg0: i32) -> (i32, i32) {
    %c0_i32 = arith.constant 0 : i32
    %c0_i32_0 = arith.constant 0 : i32
    %c0_i32_1 = arith.constant 0 : i32
    return %c0_i32, %c0_i32_0 : i32, i32
  }
  func.func @transform_4(%arg0: i32) -> (i32, i32) {
    %c0_i32 = arith.constant 0 : i32
    %c0_i32_0 = arith.constant 0 : i32
    %c0_i32_1 = arith.constant 0 : i32
    return %c0_i32, %c0_i32_0 : i32, i32
  }
  func.func @transform_5(%arg0: i32) -> (i32, i32) {
    %c0_i32 = arith.constant 0 : i32
    %c0_i32_0 = arith.constant 0 : i32
    %c0_i32_1 = arith.constant 0 : i32
    return %c0_i32, %c0_i32_0 : i32, i32
  }
  func.func @transform_6(%arg0: i32) -> (i32, i32) {
    %c0_i32 = arith.constant 0 : i32
    %c0_i32_0 = arith.constant 0 : i32
    %c0_i32_1 = arith.constant 0 : i32
    return %c0_i32, %c0_i32_0 : i32, i32
  }
  func.func @transform_7(%arg0: i32) -> (i32, i32) {
    %c0_i32 = arith.constant 0 : i32
    %c0_i32_0 = arith.constant 0 : i32
    return %c0_i32, %arg0 : i32, i32
  }
}

</mosaic_0001>

<llo_original>
// kernel: tpu_custom_call.1
$region0: #{tpu_custom_call.1}
  #allocation0 [shape = 'u32[]', space=smem, size = 0x4, offset = 0x4, fixed_abs, tag = 'smem constant byte address 0x4 - core index']
  #allocation1 [shape = 'u32[144,128]{1,0:T(1,128)}', space=vmem, size = 0x12000, scoped, tag = 'internal scratch']
  %s0 = inlined_call_operand.vmem [shape: f32[4,8], index: 0, kind: input, shape index: {}]
  %s1 = inlined_call_operand.vmem [shape: f32[8,4], index: 1, kind: input, shape index: {}]
  %s2 = inlined_call_operand.vmem [shape: f32[8,1], index: 2, kind: input, shape index: {}]
  %s3 = inlined_call_operand.vmem [shape: f32[16,8], index: 3, kind: input, shape index: {}]
  %s4 = inlined_call_operand.vmem [shape: f32[16,1], index: 4, kind: input, shape index: {}]
  %s5 = inlined_call_operand.vmem [shape: f32[3,16], index: 5, kind: input, shape index: {}]
  %s6 = inlined_call_operand.vmem [shape: f32[3,1], index: 6, kind: input, shape index: {}]
  %s7 = inlined_call_operand.hbm [shape: f32[3,8], index: 7, kind: output, shape index: {}]
  %s8 = sld [smem:[#allocation0]]
  $region38: #{tpu_custom_call.1} parent=0
    _
  %s10 = ssub.s32 1, %s8
  %s11 = scalar_select 0, %s10, %s8
  $region1: #{tpu_custom_call.1} parent=0
    #allocation2 [shape = 'u8[2048]{0}', space=vmem, size = 0x800, scoped, tag = 'output window, operand 0, single buffered']
    #allocation3 [shape = 's32[1]{0}', space=sflag, size = 0x4, scoped, tag = 'scoped memory for tpu_custom_call.1']
    %12 = vsyncpa [#allocation3], 0
    // Predicated region
    $region2: #{tpu_custom_call.1} parent=1 // pred_check
      _
    $region3: #{tpu_custom_call.1} parent=1 // pred_check_branch
      %14 = sbr.rel (0) target = $region5
    $region4: #{tpu_custom_call.1} parent=1 // pred_region
      _
    $region5: #{tpu_custom_call.1} parent=1 // pred_fallthru
      _
    // Predicated region
    $region6: #{tpu_custom_call.1} parent=1 // pred_check
      _
    $region7: #{tpu_custom_call.1} parent=1 // pred_check_branch
      %16 = sbr.rel (0) target = $region9
    $region8: #{tpu_custom_call.1} parent=1 // pred_region
      _
    $region9: #{tpu_custom_call.1} parent=1 // pred_fallthru
      _
    // Predicated region
    $region10: #{tpu_custom_call.1} parent=1 // pred_check
      _
    $region11: #{tpu_custom_call.1} parent=1 // pred_check_branch
      %18 = sbr.rel (0) target = $region13
    $region12: #{tpu_custom_call.1} parent=1 // pred_region
      _
    $region13: #{tpu_custom_call.1} parent=1 // pred_fallthru
      _
    // Predicated region
    $region14: #{tpu_custom_call.1} parent=1 // pred_check
      _
    $region15: #{tpu_custom_call.1} parent=1 // pred_check_branch
      %20 = sbr.rel (0) target = $region17
    $region16: #{tpu_custom_call.1} parent=1 // pred_region
      _
    $region17: #{tpu_custom_call.1} parent=1 // pred_fallthru
      _
    // Predicated region
    $region18: #{tpu_custom_call.1} parent=1 // pred_check
      _
    $region19: #{tpu_custom_call.1} parent=1 // pred_check_branch
      %22 = sbr.rel (0) target = $region21
    $region20: #{tpu_custom_call.1} parent=1 // pred_region
      _
    $region21: #{tpu_custom_call.1} parent=1 // pred_fallthru
      _
    // Predicated region
    $region22: #{tpu_custom_call.1} parent=1 // pred_check
      _
    $region23: #{tpu_custom_call.1} parent=1 // pred_check_branch
      %24 = sbr.rel (0) target = $region25
    $region24: #{tpu_custom_call.1} parent=1 // pred_region
      _
    $region25: #{tpu_custom_call.1} parent=1 // pred_fallthru
      _
    // Predicated region
    $region26: #{tpu_custom_call.1} parent=1 // pred_check
      _
    $region27: #{tpu_custom_call.1} parent=1 // pred_check_branch
      %26 = sbr.rel (0) target = $region29
    $region28: #{tpu_custom_call.1} parent=1 // pred_region
      _
    $region29: #{tpu_custom_call.1} parent=1 // pred_fallthru
      _
    %v27 = vld [vmem:[%s0] sm:$0xf]
    %v28 = vld [vmem:[%s1] sm:$0xff]
    %v29 = vld [vmem:[%s2] sm:$0xff]
    %31 = vset.pattern.permute.xlu0 0
    %32 = vperm.xlu0 %31, %v29
    %v33 = vpop.permute.xlu0 %32
    %36 = vset.pattern.permute.xlu0 0
    %37 = vperm.xlu0 %36, %v28
    %v38 = vpop.permute.xlu0 %37
    %v40 = vlaneseq
    %v41 = vshrl.u32 %v40, 7
    %v42 = vsub.s32 0, %v41
    %v43 = vrot.slane %v27, %v42
    %v44 = vmul.f32 %v38, %v43
    %v45 = vadd.f32 %v33, %v44
    %46 = vset.pattern.permute.xlu0 1
    %47 = vperm.xlu0 %46, %v28
    %v48 = vpop.permute.xlu0 %47
    %v50 = vlaneseq
    %v51 = vshrl.u32 %v50, 7
    %v52 = vsub.s32 1, %v51
    %v53 = vrot.slane %v27, %v52
    %v54 = vmul.f32 %v48, %v53
    %v55 = vadd.f32 %v45, %v54
    %56 = vset.pattern.permute.xlu0 2
    %57 = vperm.xlu0 %56, %v28
    %v58 = vpop.permute.xlu0 %57
    %v60 = vlaneseq
    %v61 = vshrl.u32 %v60, 7
    %v62 = vsub.s32 2, %v61
    %v63 = vrot.slane %v27, %v62
    %v64 = vmul.f32 %v58, %v63
    %v65 = vadd.f32 %v55, %v64
    %66 = vset.pattern.permute.xlu0 3
    %67 = vperm.xlu0 %66, %v28
    %v68 = vpop.permute.xlu0 %67
    %v70 = vlaneseq
    %v71 = vshrl.u32 %v70, 7
    %v72 = vsub.s32 3, %v71
    %v73 = vrot.slane %v27, %v72
    %v74 = vmul.f32 %v68, %v73
    %v75 = vadd.f32 %v65, %v74
    %v76 = vmax.f32 %v75, 0.0
    %v77 = vld [vmem:[%s3] sm:$0xff]
    %v78 = vld [vmem:[%s3 + $0x8] sm:$0xff]
    %v79 = vld [vmem:[%s4] sm:$0xff]
    %v80 = vld [vmem:[%s4 + $0x8] sm:$0xff]
    %82 = vset.pattern.permute.xlu0 0
    %83 = vperm.xlu0 %82, %v79
    %v84 = vpop.permute.xlu0 %83
    %87 = vset.pattern.permute.xlu0 0
    %88 = vperm.xlu0 %87, %v80
    %v89 = vpop.permute.xlu0 %88
    %vm91 = vcmask 64512
    %v93 = vsel %vm91, %v77, 0
    %v96 = vsel %vm91, %v78, 0
    %98 = vmatprep.subr.mxu0 0.0
    %99 = vmatpush1.msra.mxu0 %v76
    %100 = vmatprep.subr.mxu0 0.0
    %101 = vmatpush1.msra.mxu0 0.0
    %102 = vmatprep.subr.mxu0 0.0
    %103 = vmatpush1.msra.mxu0 0.0
    %104 = vmatprep.subr.mxu0 0.0
    %105 = vmatpush1.msra.mxu0 0.0
    %106 = vmatprep.subr.mxu0 0.0
    %107 = vmatpush1.msra.mxu0 0.0
    %108 = vmatprep.subr.mxu0 0.0
    %109 = vmatpush1.msra.mxu0 0.0
    %110 = vmatprep.subr.mxu0 0.0
    %111 = vmatpush1.msra.mxu0 0.0
    %112 = vmatprep.subr.mxu0 0.0
    %113 = vmatpush1.msra.mxu0 0.0
    %114 = vmatprep.subr.mxu0 0.0
    %115 = vmatpush1.msra.mxu0 0.0
    %116 = vmatprep.subr.mxu0 0.0
    %117 = vmatpush1.msra.mxu0 0.0
    %118 = vmatprep.subr.mxu0 0.0
    %119 = vmatpush1.msra.mxu0 0.0
    %120 = vmatprep.subr.mxu0 0.0
    %121 = vmatpush1.msra.mxu0 0.0
    %122 = vmatprep.subr.mxu0 0.0
    %123 = vmatpush1.msra.mxu0 0.0
    %124 = vmatprep.subr.mxu0 0.0
    %125 = vmatpush1.msra.mxu0 0.0
    %126 = vmatprep.subr.mxu0 0.0
    %127 = vmatpush1.msra.mxu0 0.0
    %128 = vmatprep.subr.mxu0 0.0
    %129 = vmatpush1.msra.mxu0 0.0
    %130 = vmatprep.subr.mxu0 0.0
    %131 = vmatpush1.msra.mxu0 0.0
    %132 = vmatprep.subr.mxu0 0.0
    %133 = vmatpush1.msra.mxu0 0.0
    %134 = vmatprep.subr.mxu0 0.0
    %135 = vmatpush1.msra.mxu0 0.0
    %136 = vmatprep.subr.mxu0 0.0
    %137 = vmatpush1.msra.mxu0 0.0
    %138 = vmatprep.subr.mxu0 0.0
    %139 = vmatpush1.msra.mxu0 0.0
    %140 = vmatprep.subr.mxu0 0.0
    %141 = vmatpush1.msra.mxu0 0.0
    %142 = vmatprep.subr.mxu0 0.0
    %143 = vmatpush1.msra.mxu0 0.0
    %144 = vmatprep.subr.mxu0 0.0
    %145 = vmatpush1.msra.mxu0 0.0
    %146 = vmatprep.subr.mxu0 0.0
    %147 = vmatpush1.msra.mxu0 0.0
    %148 = vmatprep.subr.mxu0 0.0
    %149 = vmatpush1.msra.mxu0 0.0
    %150 = vmatprep.subr.mxu0 0.0
    %151 = vmatpush1.msra.mxu0 0.0
    %152 = vmatprep.subr.mxu0 0.0
    %153 = vmatpush1.msra.mxu0 0.0
    %154 = vmatprep.subr.mxu0 0.0
    %155 = vmatpush1.msra.mxu0 0.0
    %156 = vmatprep.subr.mxu0 0.0
    %157 = vmatpush1.msra.mxu0 0.0
    %158 = vmatprep.subr.mxu0 0.0
    %159 = vmatpush1.msra.mxu0 0.0
    %160 = vmatprep.subr.mxu0 0.0
    %161 = vmatpush1.msra.mxu0 0.0
    %162 = vmatprep.mubr.f32.mxu0 0.0
    %163 = vmatmul.mubr.f32.gmra.mrb[0].mxu0 %v93
    %v164 = vpop.f32.mrb[0].mxu0
    %v165 = vadd.f32 %v84, %v164
    %v166 = vpop.f32.mrb[0].mxu0
    %167 = vmatprep.mubr.f32.mxu0 0.0
    %168 = vmatmul.mubr.f32.gmra.mrb[0].mxu0 %v96
    %v169 = vpop.f32.mrb[0].mxu0
    %v170 = vadd.f32 %v89, %v169
    %v171 = vpop.f32.mrb[0].mxu0
    %172 = vdwg.mxu0
    %v173 = vmax.f32 %v165, 0.0
    %v174 = vmax.f32 %v170, 0.0
    %v175 = vld [vmem:[%s5] sm:$0x7]
    %v176 = vld [vmem:[%s6] sm:$0x7]
    %178 = vset.pattern.permute.xlu0 0
    %179 = vperm.xlu0 %178, %v176
    %v180 = vpop.permute.xlu0 %179
    %vm182 = vcmask 130048
    %v184 = vsel %vm182, %v175, 0
    %186 = vmatprep.subr.mxu0 0.0
    %187 = vmatpush1.msra.mxu0 %v173
    %188 = vmatprep.subr.mxu0 0.0
    %189 = vmatpush1.msra.mxu0 %v174
    %190 = vmatprep.subr.mxu0 0.0
    %191 = vmatpush1.msra.mxu0 0.0
    %192 = vmatprep.subr.mxu0 0.0
    %193 = vmatpush1.msra.mxu0 0.0
    %194 = vmatprep.subr.mxu0 0.0
    %195 = vmatpush1.msra.mxu0 0.0
    %196 = vmatprep.subr.mxu0 0.0
    %197 = vmatpush1.msra.mxu0 0.0
    %198 = vmatprep.subr.mxu0 0.0
    %199 = vmatpush1.msra.mxu0 0.0
    %200 = vmatprep.subr.mxu0 0.0
    %201 = vmatpush1.msra.mxu0 0.0
    %202 = vmatprep.subr.mxu0 0.0
    %203 = vmatpush1.msra.mxu0 0.0
    %204 = vmatprep.subr.mxu0 0.0
    %205 = vmatpush1.msra.mxu0 0.0
    %206 = vmatprep.subr.mxu0 0.0
    %207 = vmatpush1.msra.mxu0 0.0
    %208 = vmatprep.subr.mxu0 0.0
    %209 = vmatpush1.msra.mxu0 0.0
    %210 = vmatprep.subr.mxu0 0.0
    %211 = vmatpush1.msra.mxu0 0.0
    %212 = vmatprep.subr.mxu0 0.0
    %213 = vmatpush1.msra.mxu0 0.0
    %214 = vmatprep.subr.mxu0 0.0
    %215 = vmatpush1.msra.mxu0 0.0
    %216 = vmatprep.subr.mxu0 0.0
    %217 = vmatpush1.msra.mxu0 0.0
    %218 = vmatprep.subr.mxu0 0.0
    %219 = vmatpush1.msra.mxu0 0.0
    %220 = vmatprep.subr.mxu0 0.0
    %221 = vmatpush1.msra.mxu0 0.0
    %222 = vmatprep.subr.mxu0 0.0
    %223 = vmatpush1.msra.mxu0 0.0
    %224 = vmatprep.subr.mxu0 0.0
    %225 = vmatpush1.msra.mxu0 0.0
    %226 = vmatprep.subr.mxu0 0.0
    %227 = vmatpush1.msra.mxu0 0.0
    %228 = vmatprep.subr.mxu0 0.0
    %229 = vmatpush1.msra.mxu0 0.0
    %230 = vmatprep.subr.mxu0 0.0
    %231 = vmatpush1.msra.mxu0 0.0
    %232 = vmatprep.subr.mxu0 0.0
    %233 = vmatpush1.msra.mxu0 0.0
    %234 = vmatprep.subr.mxu0 0.0
    %235 = vmatpush1.msra.mxu0 0.0
    %236 = vmatprep.subr.mxu0 0.0
    %237 = vmatpush1.msra.mxu0 0.0
    %238 = vmatprep.subr.mxu0 0.0
    %239 = vmatpush1.msra.mxu0 0.0
    %240 = vmatprep.subr.mxu0 0.0
    %241 = vmatpush1.msra.mxu0 0.0
    %242 = vmatprep.subr.mxu0 0.0
    %243 = vmatpush1.msra.mxu0 0.0
    %244 = vmatprep.subr.mxu0 0.0
    %245 = vmatpush1.msra.mxu0 0.0
    %246 = vmatprep.subr.mxu0 0.0
    %247 = vmatpush1.msra.mxu0 0.0
    %248 = vmatprep.subr.mxu0 0.0
    %249 = vmatpush1.msra.mxu0 0.0
    %250 = vmatprep.mubr.f32.mxu0 0.0
    %251 = vmatmul.mubr.f32.gmra.mrb[0].mxu0 %v184
    %v252 = vpop.f32.mrb[0].mxu0
    %v253 = vadd.f32 %v180, %v252
    %v254 = vpop.f32.mrb[0].mxu0
    %255 = vdwg.mxu0
    %256 = vst [vmem:[#allocation2] sm:$0x7] %v253
    // Predicated region
    $region30: #{tpu_custom_call.1} parent=1 // pred_check
      _
    $region31: #{tpu_custom_call.1} parent=1 // pred_check_branch
      %258 = sbr.rel (0) target = $region33
    $region32: #{tpu_custom_call.1} parent=1 // pred_region
      %s260 = ssub.s32 64, 64
      %261 = vsyncadd [#allocation3], %s260
      %s263 = sshll.u32 [#allocation2], 4
      %s264 = int_to_ptr.vmem [resolvable:$true] %s263
      %266 = dma.vmem_to_hbm [thread:$0]  %s264, 64, %s7, [#allocation3]
    $region33: #{tpu_custom_call.1} parent=1 // pred_fallthru
      _
    // Predicated region
    $region34: #{tpu_custom_call.1} parent=1 // pred_check
      _
    $region35: #{tpu_custom_call.1} parent=1 // pred_check_branch
      %268 = sbr.rel (0) target = $region37
    $region36: #{tpu_custom_call.1} parent=1 // pred_region
      %269 = dma.done [#allocation3], 64
    $region37: #{tpu_custom_call.1} parent=1 // pred_fallthru
      _
    %270 = vsyncpa [#allocation3], 1

</llo_original>
